<compile_context>
chip_gen: v6e
topology: v6e:2x2x1
jax: 0.10.0
libtpu: 0.0.40
codegen_flags: <defaults>
</compile_context>

<pallas_src>
import functools

import jax
import jax.numpy as jnp
from jax.experimental import pallas as pl
from jax.experimental.pallas import tpu as pltpu


def _ceil_to(x, m):
    return ((x + m - 1) // m) * m


# ----------------------------------------------------------------------------
# Kernel 1: fused detectors + per-clip temporal max (one step per (clip, chunk))
# ----------------------------------------------------------------------------
def _detector_kernel(x_ref, cw_ref, cb_ref, fw_ref, fb_ref, feats_ref,
                     *, C, HW, CLSP):
    # x_ref    : (TDC, C, HW)   f32  chunk of frames (clip dim squeezed away)
    # cw_ref   : (C, F2S, 1)    f32  fused 1x1 conv weight, hidden on sublanes
    # cb_ref   : (F2S, 1)       f32  fused conv bias
    # fw_ref   : (F2S, CLSP)    bf16 fused (block-diagonal) detector fc weight
    # fb_ref   : (1, CLSP)      f32  fused detector fc bias
    # feats_ref: (1, 1, CLSP)   f32  running per-clip column max (accumulator,
    #                                VMEM-resident across the TD-chunk axis)
    t = pl.program_id(1)

    @pl.when(t == 0)
    def _init():
        feats_ref[...] = jnp.full((1, 1, CLSP), -jnp.inf, jnp.float32)

    x = x_ref[...]                                   # (TDC, C, HW)
    cw = cw_ref[...]                                 # (C, F2S, 1)

    # 1x1 conv over C channels as C VPU broadcast-FMAs (no MXU K=3 matmul):
    # acc[td, f, hw] = sum_c x[td, c, hw] * cw[c, f]
    acc = x[:, 0, :][:, None, :] * cw[0]
    for c in range(1, C):
        acc = acc + x[:, c, :][:, None, :] * cw[c]
    h = jnp.maximum(acc + cb_ref[...], 0.0)          # (TDC, F2S, HW)

    # Per-frame global average pool: lane reduce over HW (no pooling matrix).
    g = jnp.sum(h, axis=-1) * (1.0 / HW)             # (TDC, F2S)

    # Fused detector fc -> [scene | object | 0-pad] logits; bf16 MXU operands,
    # f32 accumulation.
    logits = jnp.dot(g.astype(jnp.bfloat16), fw_ref[...],
                     preferred_element_type=jnp.float32) + fb_ref[...]  # (TDC,CLSP)

    # Running max over frames (max over D then T == max over all T*D frames).
    m = jnp.max(logits, axis=0, keepdims=True).reshape(1, 1, CLSP)
    feats_ref[...] = jnp.maximum(feats_ref[...], m)

    @pl.when(t == pl.num_programs(1) - 1)
    def _finalize():
        # relu(concat); dropout is eval-mode identity.
        feats_ref[...] = jnp.maximum(feats_ref[...], 0.0)


# ----------------------------------------------------------------------------
# Kernel 2: event head over the whole batch (one step, M = N rows per matmul)
# ----------------------------------------------------------------------------
def _event_head_kernel(feats_ref, w1_ref, b1_ref, w2_ref, b2_ref, o_ref):
    f = feats_ref[...][:, 0, :]                                     # (N, CLSP)
    hid = jnp.dot(f.astype(jnp.bfloat16), w1_ref[...],
                  preferred_element_type=jnp.float32) + b1_ref[...]  # (N, L)
    hid = jnp.maximum(hid, 0.0)              # relu; dropout = identity (eval)
    out = jnp.dot(hid.astype(jnp.bfloat16), w2_ref[...],
                  preferred_element_type=jnp.float32) + b2_ref[...]  # (N, EP)
    o_ref[...] = out                                                 # lane-dense


# ----------------------------------------------------------------------------
# Forward wrapper
# ----------------------------------------------------------------------------
def event_model_forward(sceobj_frame, action_frame, fused, td_chunk=None):
    N, T, D, C, H, W = sceobj_frame.shape
    _, _, _, _, aH, aW = action_frame.shape   # shape-only, as in the PyTorch code
    TD, HW = T * D, H * W

    if td_chunk is None:
        td_chunk = max(d for d in range(1, min(TD, 8) + 1) if TD % d == 0)
    assert TD % td_chunk == 0, (TD, td_chunk)

    # Pure reshape of NCHW -> (N, TD, C, HW): no transpose, channels on sublanes.
    x = sceobj_frame.reshape(N, TD, C, HW)

    cw, cb, fw, fb = fused["cw"], fused["cb"], fused["fw"], fused["fb"]
    w1, b1, w2, b2 = fused["w1"], fused["b1"], fused["w2"], fused["b2"]
    F2S = cw.shape[1]
    CLSP = fw.shape[1]
    L = w1.shape[1]
    EP = w2.shape[1]
    E = fused["event_classes"]

    det_kernel = functools.partial(_detector_kernel, C=C, HW=HW, CLSP=CLSP)
    det_cost = pl.CostEstimate(
        flops=int(2 * N * TD * HW * C * F2S + 2 * N * TD * F2S * CLSP),
        transcendentals=0,
        bytes_accessed=int(x.size * 4 + (cw.size + cb.size + fb.size) * 4
                           + fw.size * 2 + N * CLSP * 4))

    feats = pl.pallas_call(
        det_kernel,
        out_shape=jax.ShapeDtypeStruct((N, 1, CLSP), jnp.float32),
        grid=(N, TD // td_chunk),
        in_specs=[
            # Leading clip dim squeezed; minor (C, HW) dims equal full array dims.
            pl.BlockSpec((pl.Squeezed(), td_chunk, C, HW),
                         lambda n, t: (n, t, 0, 0)),
            pl.BlockSpec((C, F2S, 1), lambda n, t: (0, 0, 0)),
            pl.BlockSpec((F2S, 1), lambda n, t: (0, 0)),
            pl.BlockSpec((F2S, CLSP), lambda n, t: (0, 0)),
            pl.BlockSpec((1, CLSP), lambda n, t: (0, 0)),
        ],
        out_specs=pl.BlockSpec((1, 1, CLSP), lambda n, t: (n, 0, 0)),
        compiler_params=pltpu.CompilerParams(
            dimension_semantics=("parallel", "arbitrary"),
            vmem_limit_bytes=32 * 1024 * 1024,  # raise toward 128 MiB on v5e/v6e
        ),
        cost_estimate=det_cost,
    )(x, cw, cb, fw, fb)

    head_cost = pl.CostEstimate(
        flops=int(2 * N * (CLSP * L + L * EP)),
        transcendentals=0,
        bytes_accessed=int(N * CLSP * 4 + (CLSP * L + L * EP) * 2
                           + (L + EP) * 4 + N * EP * 4))

    out = pl.pallas_call(
        _event_head_kernel,
        out_shape=jax.ShapeDtypeStruct((N, EP), jnp.float32),
        grid=(1,),
        in_specs=[
            pl.BlockSpec((N, 1, CLSP), lambda i: (0, 0, 0)),
            pl.BlockSpec((CLSP, L), lambda i: (0, 0)),
            pl.BlockSpec((1, L), lambda i: (0, 0)),
            pl.BlockSpec((L, EP), lambda i: (0, 0)),
            pl.BlockSpec((1, EP), lambda i: (0, 0)),
        ],
        out_specs=pl.BlockSpec((N, EP), lambda i: (0, 0)),
        compiler_params=pltpu.CompilerParams(dimension_semantics=("arbitrary",)),
        cost_estimate=head_cost,
    )(feats, w1, b1, w2, b2)

    return out[:, :E]


# ----------------------------------------------------------------------------
# One-time (hoisted) parameter fusion / padding
# ----------------------------------------------------------------------------
def prepare_fused_params(params):
    cw_s, cb_s, fw_s, fb_s = params["scene_det"]
    cw_o, cb_o, fw_o, fb_o = params["object_det"]
    C = cw_s.shape[0]
    Fs, S = fw_s.shape
    Fo, O = fw_o.shape
    F2, CLS = Fs + Fo, S + O
    F2S = _ceil_to(F2, 8)      # hidden axis lives on sublanes of h -> pad to 8
    CLSP = _ceil_to(CLS, 128)  # class axis lives on lanes -> pad to 128

    # Fused 1x1 conv: both detectors' hidden units stacked, stored with the
    # hidden axis on sublanes so the kernel's per-channel VPU FMA needs no relayout.
    cw = jnp.zeros((C, F2S), jnp.float32).at[:, :Fs].set(cw_s).at[:, Fs:F2].set(cw_o)
    cb = jnp.zeros((1, F2S), jnp.float32).at[:, :Fs].set(cb_s).at[:, Fs:F2].set(cb_o)
    cw = cw.reshape(C, F2S, 1)
    cb = cb.reshape(F2S, 1)

    # Fused detector fc: block-diagonal -> columns are [scene | object | 0-pad].
    fw = jnp.zeros((F2S, CLSP), jnp.float32)
    fw = fw.at[:Fs, :S].set(fw_s).at[Fs:F2, S:CLS].set(fw_o)
    fb = jnp.zeros((1, CLSP), jnp.float32).at[:, :S].set(fb_s).at[:, S:CLS].set(fb_o)

    # Event head: pad w1 rows to CLSP (zero rows align with zero-padded feats) and
    # w2/b2 columns to a 128 multiple so the final store is an unmasked vst.
    w1, b1, w2, b2 = params["w1"], params["b1"], params["w2"], params["b2"]
    L = w1.shape[1]
    E = w2.shape[1]
    EP = _ceil_to(E, 128)
    w1p = jnp.zeros((CLSP, L), jnp.float32).at[:CLS, :].set(w1)
    w2p = jnp.zeros((L, EP), jnp.float32).at[:, :E].set(w2)
    b2p = jnp.zeros((1, EP), jnp.float32).at[:, :E].set(b2)

    return {
        "cw": cw, "cb": cb,
        "fw": fw.astype(jnp.bfloat16), "fb": fb,
        "w1": w1p.astype(jnp.bfloat16), "b1": b1,
        "w2": w2p.astype(jnp.bfloat16), "b2": b2p,
        "event_classes": E,
    }


# ----------------------------------------------------------------------------
# Pure-JAX f32 reference (unfused) and parameter init
# ----------------------------------------------------------------------------
def reference_forward(sceobj_frame, params):
    N, T, D, C, H, W = sceobj_frame.shape
    x = sceobj_frame.reshape(-1, C, H * W)                        # (N*T*D, C, HW)

    def det(cw, cb, fw, fb):
        h = jax.nn.relu(jnp.einsum("bcp,cf->bpf", x, cw) + cb)    # (B, HW, F)
        g = jnp.mean(h, axis=1)                                   # (B, F)
        return g @ fw + fb

    sf = det(*params["scene_det"]).reshape(N, T, D, -1)
    of = det(*params["object_det"]).reshape(N, T, D, -1)
    sf = sf.max(axis=2).max(axis=1)
    of = of.max(axis=2).max(axis=1)
    cat = jax.nn.relu(jnp.concatenate([sf, of], axis=1))
    hid = jax.nn.relu(cat @ params["w1"] + params["b1"])
    return hid @ params["w2"] + params["b2"]


def init_params(key, C, scene_classes, object_classes, latent, event_classes,
                det_hidden):
    ks = jax.random.split(key, 8)
    concept = scene_classes + object_classes

    def detector(k0, k1, cls):
        cw = 0.05 * jax.random.normal(k0, (C, det_hidden), jnp.float32)
        cb = jnp.zeros((1, det_hidden), jnp.float32)
        fw = 0.05 * jax.random.normal(k1, (det_hidden, cls), jnp.float32)
        fb = jnp.zeros((1, cls), jnp.float32)
        return (cw, cb, fw, fb)

    return {
        "scene_det": detector(ks[0], ks[1], scene_classes),
        "object_det": detector(ks[2], ks[3], object_classes),
        # nn.Linear init in Event_Model: normal(0, 0.01) weight, zero bias.
        "w1": 0.01 * jax.random.normal(ks[4], (concept, latent), jnp.float32),
        "b1": jnp.zeros((1, latent), jnp.float32),
        "w2": 0.01 * jax.random.normal(ks[5], (latent, event_classes), jnp.float32),
        "b2": jnp.zeros((1, event_classes), jnp.float32),
    }


if __name__ == "__main__":
    # Small shapes consistent with the module's forward signature.
    N, T, D, C, H, W = 2, 3, 2, 3, 8, 8
    aH, aW = 8, 8
    scene_classes, object_classes = 8, 16
    latent, event_classes, det_hidden = 512, 10, 16

    key = jax.random.PRNGKey(0)
    k_in, k_act, k_par = jax.random.split(key, 3)
    sceobj_frame = jax.random.normal(k_in, (N, T, D, C, H, W), jnp.float32)
    action_frame = jax.random.normal(k_act, (N, T, D, C, aH, aW), jnp.float32)

    params = init_params(k_par, C, scene_classes, object_classes, latent,
                         event_classes, det_hidden)
    fused = prepare_fused_params(params)      # hoisted once, reused every forward

    # td_chunk=2 -> 3 reduction steps per clip: exercises the chunked running max.
    out = event_model_forward(sceobj_frame, action_frame, fused, td_chunk=2)
    out = jax.block_until_ready(out)

    ref = reference_forward(sceobj_frame, params)
    assert out.shape == (N, event_classes), out.shape
    # bf16 MXU operands (f32 accumulation) -> relative-error check vs f32 reference.
    err = float(jnp.max(jnp.abs(out - ref)))
    scale = float(jnp.max(jnp.abs(ref)))
    assert err <= 0.05 * scale + 1e-5, (err, scale)

    print("KERNEL_OK")
</pallas_src>

<mosaic_0001>
module attributes {stable_mosaic.version = 11 : i64} {
  func.func @_detector_kernel(%arg0: i32, %arg1: i32, %arg2: memref<1x2x3x64xf32, #tpu.memory_space<vmem>>, %arg3: memref<3x32x1xf32, #tpu.memory_space<vmem>>, %arg4: memref<32x1xf32, #tpu.memory_space<vmem>>, %arg5: memref<32x128xbf16, #tpu.memory_space<vmem>>, %arg6: memref<1x128xf32, #tpu.memory_space<vmem>>, %arg7: memref<1x1x128xf32, #tpu.memory_space<vmem>>) attributes {dimension_semantics = [#tpu.dimension_semantics<parallel>, #tpu.dimension_semantics<arbitrary>], iteration_bounds = array<i64: 2, 3>, scalar_prefetch = 0 : i64, scratch_operands = 0 : i64, tpu.core_type = #tpu.core_type<tc>, window_params = [{transform_indices = @transform_0, window_bounds = array<i64: 1, 2, 3, 64>}, {pipeline_mode = #tpu.pipeline_mode<synchronous>, transform_indices = @transform_1, window_bounds = array<i64: 3, 32, 1>}, {pipeline_mode = #tpu.pipeline_mode<synchronous>, transform_indices = @transform_2, window_bounds = array<i64: 32, 1>}, {pipeline_mode = #tpu.pipeline_mode<synchronous>, transform_indices = @transform_3, window_bounds = array<i64: 32, 128>}, {pipeline_mode = #tpu.pipeline_mode<synchronous>, transform_indices = @transform_4, window_bounds = array<i64: 1, 128>}, {transform_indices = @transform_5, window_bounds = array<i64: 1, 1, 128>}]} {
    %c0_i32 = arith.constant 0 : i32
    %0 = arith.cmpi eq, %arg1, %c0_i32 : i32
    %1 = arith.extui %0 : i1 to i32
    %c0_i32_0 = arith.constant 0 : i32
    %2 = arith.cmpi ne, %1, %c0_i32_0 : i32
    scf.if %2 {
      %cst_24 = arith.constant 0xFF800000 : f32
      %59 = vector.broadcast %cst_24 : f32 to vector<1x1x128xf32>
      %c0_25 = arith.constant 0 : index
      %c0_26 = arith.constant 0 : index
      %c0_27 = arith.constant 0 : index
      %60 = vector.load %arg7[%c0_25, %c0_26, %c0_27] : memref<1x1x128xf32, #tpu.memory_space<vmem>>, vector<1x1x128xf32>
      tpu.vector_store %arg7[%c0_25, %c0_26, %c0_27], %59 {strides = array<i32>} : memref<1x1x128xf32, #tpu.memory_space<vmem>>, vector<1x1x128xf32>,
    } else {
    }
    %c0 = arith.constant 0 : index
    %c0_1 = arith.constant 0 : index
    %c0_2 = arith.constant 0 : index
    %c0_3 = arith.constant 0 : index
    %3 = vector.load %arg2[%c0, %c0_1, %c0_2, %c0_3] : memref<1x2x3x64xf32, #tpu.memory_space<vmem>>, vector<1x2x3x64xf32>
    %4 = vector.shape_cast %3 : vector<1x2x3x64xf32> to vector<2x3x64xf32>
    %c0_4 = arith.constant 0 : index
    %c0_5 = arith.constant 0 : index
    %c0_6 = arith.constant 0 : index
    %5 = vector.load %arg3[%c0_4, %c0_5, %c0_6] : memref<3x32x1xf32, #tpu.memory_space<vmem>>, vector<3x32x1xf32>
    %6 = vector.extract_strided_slice %4 {offsets = [0, 0, 0], sizes = [2, 1, 64], strides = [1, 1, 1]} : vector<2x3x64xf32> to vector<2x1x64xf32>
    %7 = vector.shape_cast %6 : vector<2x1x64xf32> to vector<2x64xf32>
    %8 = vector.shape_cast %7 : vector<2x64xf32> to vector<2x1x64xf32>
    %9 = vector.extract_strided_slice %5 {offsets = [0, 0, 0], sizes = [1, 32, 1], strides = [1, 1, 1]} : vector<3x32x1xf32> to vector<1x32x1xf32>
    %10 = vector.shape_cast %9 : vector<1x32x1xf32> to vector<32x1xf32>
    %11 = vector.shape_cast %10 : vector<32x1xf32> to vector<1x32x1xf32>
    %12 = vector.broadcast %8 : vector<2x1x64xf32> to vector<2x32x64xf32>
    %13 = vector.broadcast %11 : vector<1x32x1xf32> to vector<2x32x64xf32>
    %14 = arith.mulf %12, %13 : vector<2x32x64xf32>
    %15 = vector.extract_strided_slice %4 {offsets = [0, 1, 0], sizes = [2, 1, 64], strides = [1, 1, 1]} : vector<2x3x64xf32> to vector<2x1x64xf32>
    %16 = vector.shape_cast %15 : vector<2x1x64xf32> to vector<2x64xf32>
    %17 = vector.shape_cast %16 : vector<2x64xf32> to vector<2x1x64xf32>
    %18 = vector.extract_strided_slice %5 {offsets = [1, 0, 0], sizes = [1, 32, 1], strides = [1, 1, 1]} : vector<3x32x1xf32> to vector<1x32x1xf32>
    %19 = vector.shape_cast %18 : vector<1x32x1xf32> to vector<32x1xf32>
    %20 = vector.shape_cast %19 : vector<32x1xf32> to vector<1x32x1xf32>
    %21 = vector.broadcast %17 : vector<2x1x64xf32> to vector<2x32x64xf32>
    %22 = vector.broadcast %20 : vector<1x32x1xf32> to vector<2x32x64xf32>
    %23 = arith.mulf %21, %22 : vector<2x32x64xf32>
    %24 = arith.addf %14, %23 : vector<2x32x64xf32>
    %25 = vector.extract_strided_slice %4 {offsets = [0, 2, 0], sizes = [2, 1, 64], strides = [1, 1, 1]} : vector<2x3x64xf32> to vector<2x1x64xf32>
    %26 = vector.shape_cast %25 : vector<2x1x64xf32> to vector<2x64xf32>
    %27 = vector.shape_cast %26 : vector<2x64xf32> to vector<2x1x64xf32>
    %28 = vector.extract_strided_slice %5 {offsets = [2, 0, 0], sizes = [1, 32, 1], strides = [1, 1, 1]} : vector<3x32x1xf32> to vector<1x32x1xf32>
    %29 = vector.shape_cast %28 : vector<1x32x1xf32> to vector<32x1xf32>
    %30 = vector.shape_cast %29 : vector<32x1xf32> to vector<1x32x1xf32>
    %31 = vector.broadcast %27 : vector<2x1x64xf32> to vector<2x32x64xf32>
    %32 = vector.broadcast %30 : vector<1x32x1xf32> to vector<2x32x64xf32>
    %33 = arith.mulf %31, %32 : vector<2x32x64xf32>
    %34 = arith.addf %24, %33 : vector<2x32x64xf32>
    %c0_7 = arith.constant 0 : index
    %c0_8 = arith.constant 0 : index
    %35 = vector.load %arg4[%c0_7, %c0_8] : memref<32x1xf32, #tpu.memory_space<vmem>>, vector<32x1xf32>
    %36 = vector.shape_cast %35 : vector<32x1xf32> to vector<1x32x1xf32>
    %37 = vector.broadcast %36 : vector<1x32x1xf32> to vector<2x32x64xf32>
    %38 = arith.addf %34, %37 : vector<2x32x64xf32>
    %cst = arith.constant 0.000000e+00 : f32
    %39 = vector.broadcast %cst : f32 to vector<2x32x64xf32>
    %40 = arith.maximumf %38, %39 : vector<2x32x64xf32>
    %cst_9 = arith.constant dense<0.000000e+00> : vector<2x32xf32>
    %41 = vector.multi_reduction <add>, %40, %cst_9 [2] : vector<2x32x64xf32> to vector<2x32xf32>
    %cst_10 = arith.constant 1.562500e-02 : f32
    %42 = vector.broadcast %cst_10 : f32 to vector<2x32xf32>
    %43 = arith.mulf %41, %42 : vector<2x32xf32>
    %44 = arith.truncf %43 : vector<2x32xf32> to vector<2x32xbf16>
    %c0_11 = arith.constant 0 : index
    %c0_12 = arith.constant 0 : index
    %45 = vector.load %arg5[%c0_11, %c0_12] : memref<32x128xbf16, #tpu.memory_space<vmem>>, vector<32x128xbf16>
    %cst_13 = arith.constant dense<0.000000e+00> : vector<2x128xf32>
    %46 = tpu.matmul %44, %45, %cst_13 {dimension_numbers = #tpu.dot_dimension_numbers<[1], [0], [0], [1], [0, 0, 1, 1], [], []>} : vector<2x32xbf16>, vector<32x128xbf16>, vector<2x128xf32> -> vector<2x128xf32>
    %c0_14 = arith.constant 0 : index
    %c0_15 = arith.constant 0 : index
    %47 = vector.load %arg6[%c0_14, %c0_15] : memref<1x128xf32, #tpu.memory_space<vmem>>, vector<1x128xf32>
    %48 = vector.broadcast %47 : vector<1x128xf32> to vector<2x128xf32>
    %49 = arith.addf %46, %48 : vector<2x128xf32>
    %cst_16 = arith.constant dense<0xFF800000> : vector<128xf32>
    %50 = vector.multi_reduction <maximumf>, %49, %cst_16 [0] : vector<2x128xf32> to vector<128xf32>
    %51 = vector.shape_cast %50 : vector<128xf32> to vector<1x128xf32>
    %52 = vector.shape_cast %51 : vector<1x128xf32> to vector<1x1x128xf32>
    %c0_17 = arith.constant 0 : index
    %c0_18 = arith.constant 0 : index
    %c0_19 = arith.constant 0 : index
    %53 = vector.load %arg7[%c0_17, %c0_18, %c0_19] : memref<1x1x128xf32, #tpu.memory_space<vmem>>, vector<1x1x128xf32>
    %54 = arith.maximumf %53, %52 : vector<1x1x128xf32>
    %c0_20 = arith.constant 0 : index
    %c0_21 = arith.constant 0 : index
    %c0_22 = arith.constant 0 : index
    %55 = vector.load %arg7[%c0_20, %c0_21, %c0_22] : memref<1x1x128xf32, #tpu.memory_space<vmem>>, vector<1x1x128xf32>
    tpu.vector_store %arg7[%c0_20, %c0_21, %c0_22], %54 {strides = array<i32>} : memref<1x1x128xf32, #tpu.memory_space<vmem>>, vector<1x1x128xf32>,
    %c2_i32 = arith.constant 2 : i32
    %56 = arith.cmpi eq, %arg1, %c2_i32 : i32
    %57 = arith.extui %56 : i1 to i32
    %c0_i32_23 = arith.constant 0 : i32
    %58 = arith.cmpi ne, %57, %c0_i32_23 : i32
    scf.if %58 {
      %c0_24 = arith.constant 0 : index
      %c0_25 = arith.constant 0 : index
      %c0_26 = arith.constant 0 : index
      %59 = vector.load %arg7[%c0_24, %c0_25, %c0_26] : memref<1x1x128xf32, #tpu.memory_space<vmem>>, vector<1x1x128xf32>
      %cst_27 = arith.constant 0.000000e+00 : f32
      %60 = vector.broadcast %cst_27 : f32 to vector<1x1x128xf32>
      %61 = arith.maximumf %59, %60 : vector<1x1x128xf32>
      %c0_28 = arith.constant 0 : index
      %c0_29 = arith.constant 0 : index
      %c0_30 = arith.constant 0 : index
      %62 = vector.load %arg7[%c0_28, %c0_29, %c0_30] : memref<1x1x128xf32, #tpu.memory_space<vmem>>, vector<1x1x128xf32>
      tpu.vector_store %arg7[%c0_28, %c0_29, %c0_30], %61 {strides = array<i32>} : memref<1x1x128xf32, #tpu.memory_space<vmem>>, vector<1x1x128xf32>,
    } else {
    }
    return
  }
  func.func @transform_0(%arg0: i32, %arg1: i32) -> (i32, i32, i32, i32) {
    %c0_i32 = arith.constant 0 : i32
    %c0_i32_0 = arith.constant 0 : i32
    %c0_i32_1 = arith.constant 0 : i32
    return %arg0, %arg1, %c0_i32, %c0_i32_0 : i32, i32, i32, i32
  }
  func.func @transform_1(%arg0: i32, %arg1: i32) -> (i32, i32, i32) {
    %c0_i32 = arith.constant 0 : i32
    %c0_i32_0 = arith.constant 0 : i32
    %c0_i32_1 = arith.constant 0 : i32
    %c0_i32_2 = arith.constant 0 : i32
    return %c0_i32, %c0_i32_0, %c0_i32_1 : i32, i32, i32
  }
  func.func @transform_2(%arg0: i32, %arg1: i32) -> (i32, i32) {
    %c0_i32 = arith.constant 0 : i32
    %c0_i32_0 = arith.constant 0 : i32
    %c0_i32_1 = arith.constant 0 : i32
    return %c0_i32, %c0_i32_0 : i32, i32
  }
  func.func @transform_3(%arg0: i32, %arg1: i32) -> (i32, i32) {
    %c0_i32 = arith.constant 0 : i32
    %c0_i32_0 = arith.constant 0 : i32
    %c0_i32_1 = arith.constant 0 : i32
    return %c0_i32, %c0_i32_0 : i32, i32
  }
  func.func @transform_4(%arg0: i32, %arg1: i32) -> (i32, i32) {
    %c0_i32 = arith.constant 0 : i32
    %c0_i32_0 = arith.constant 0 : i32
    %c0_i32_1 = arith.constant 0 : i32
    return %c0_i32, %c0_i32_0 : i32, i32
  }
  func.func @transform_5(%arg0: i32, %arg1: i32) -> (i32, i32, i32) {
    %c0_i32 = arith.constant 0 : i32
    %c0_i32_0 = arith.constant 0 : i32
    %c0_i32_1 = arith.constant 0 : i32
    return %arg0, %c0_i32, %c0_i32_0 : i32, i32, i32
  }
}

</mosaic_0001>

<llo_original>
// kernel: tpu_custom_call.1
$region0: #{tpu_custom_call.1}
  #allocation0 [shape = 'u32[]', space=smem, size = 0x4, offset = 0x4, fixed_abs, tag = 'smem constant byte address 0x4 - core index']
  #allocation1 [shape = 'u32[144,128]{1,0:T(1,128)}', space=vmem, size = 0x12000, scoped, tag = 'internal scratch']
  %s0 = inlined_call_operand.vmem [shape: f32[2,6,3,64], index: 0, kind: input, shape index: {}]
  %s1 = inlined_call_operand.vmem [shape: f32[3,32,1], index: 1, kind: input, shape index: {}]
  %s2 = inlined_call_operand.vmem [shape: f32[32,1], index: 2, kind: input, shape index: {}]
  %s3 = inlined_call_operand.vmem [shape: bf16[32,128], index: 3, kind: input, shape index: {}]
  %s4 = inlined_call_operand.vmem [shape: f32[1,128], index: 4, kind: input, shape index: {}]
  %s5 = inlined_call_operand.hbm [shape: f32[2,1,128], index: 5, kind: output, shape index: {}]
  %s6 = sld [smem:[#allocation0]]
  $region61: #{tpu_custom_call.1} parent=0
    _
  %s8 = ssub.s32 1, %s6
  %s9 = scalar_select 0, %s8, %s6
  $region1: #{tpu_custom_call.1} parent=0
    #allocation2 [shape = 'u8[1024]{0}', space=vmem, size = 0x400, scoped, tag = 'output window, operand 0']
    #allocation3 [shape = 's32[2]{0}', space=sflag, size = 0x8, scoped, tag = 'scoped memory for tpu_custom_call.1']
    %10 = vsyncpa [#allocation3], 0
    %s11 = scalar_lea.sflag [#allocation3], 1
    %12 = vsyncpa %s11, 0
    loop: start=0, step=1, limit=8
    $region2: #{tpu_custom_call.1} parent=1 // loop_pre_header
      _
    $region3: #{tpu_custom_call.1} parent=1 // loop_header
      %s14 = sphi 0, %s18
      %p15 = scmp.ge.s32.totalorder %s14, 8
      %s21 = sphi 0, %s33
      %s22 = sphi 0, %s29
      %s23 = sphi 0, %s21
      %s24 = sphi 0, %s22
      %s25 = sphi 0, %s23
      %s26 = sphi 0, %s24
      %s38 = sphi 0, %s40
      %s41 = sphi 0, %s38
      %s42 = sphi 0, %s41
      %s58 = sphi 0, %s42
      %s62 = sphi 0, %s62
      %s64 = sphi 0, %s62
      %s65 = sphi 0, %s64
      %s79 = sphi 0, %s65
      %s83 = sphi 0, %s83
      %s85 = sphi 0, %s83
      %s86 = sphi 0, %s85
      %s100 = sphi 0, %s86
      %s104 = sphi 0, %s104
      %s106 = sphi 0, %s104
      %s107 = sphi 0, %s106
      %s121 = sphi 0, %s107
      %s125 = sphi 0, %s125
      %s127 = sphi 0, %s125
      %s128 = sphi 0, %s127
      %s142 = sphi 0, %s128
      %s148 = sphi 0, %s150
      %s151 = sphi 0, %s148
      %s152 = sphi 0, %s151
      %s168 = sphi 0, %s152
    $region4: #{tpu_custom_call.1} parent=1 // loop_header_branch
      %17 = sbr.rel (%p15) target = $region8
    $region5: #{tpu_custom_call.1} parent=1 // loop_body
      %s19 = ssub.s32 %s14, 1
      %s20 = ssub.s32 %s14, 2
      %s27 = sadd.s32 1, %s22
      %p28 = scmp.ge.s32.totalorder %s27, 3
      %s29 = scalar_select %p28, 0, %s27
      %s30 = sadd.s32 1, %s21
      %s31 = scalar_select %p28, %s30, %s21
      %p32 = scmp.ge.s32.totalorder %s31, 2
      %s33 = scalar_select %p32, 0, %s31
      %s34 = ssub.s32 %s21, %s33
      %s35 = ssub.s32 %s22, %s29
      %s36 = sor.u32 %s34, %s35
      %p37 = scmp.eq.s32.totalorder %s36, 0
      %s39 = sadd.s32 %s38, 1
      %s40 = scalar_select %p37, %s38, %s39
      %p43 = pneg %p37
      %p44 = scmp.eq.s32.totalorder %s14, 5
      %p45 = por %p43, %p44
      %p46 = scmp.ne.s32.totalorder %s38, %s41
      %p47 = scmp.eq.s32.totalorder %s14, 0
      %p48 = por %p46, %p47
      %p49 = scmp.ne.s32.totalorder %s38, %s41
      %p50 = scmp.eq.s32.totalorder %s19, 5
      %p51 = por %p49, %p50
      %p52 = scmp.ne.s32.totalorder %s41, %s42
      %p53 = scmp.eq.s32.totalorder %s19, 0
      %p54 = por %p52, %p53
      %p55 = scmp.ne.s32.totalorder %s41, %s42
      %p56 = scmp.eq.s32.totalorder %s20, 5
      %p57 = por %p55, %p56
      %p59 = scmp.ne.s32.totalorder %s42, %s58
      %p60 = scmp.eq.s32.totalorder %s20, 0
      %p61 = por %p59, %p60
      %s63 = sadd.s32 %s62, 1
      %p66 = scmp.eq.s32.totalorder %s14, 5
      %p67 = scmp.ne.s32.totalorder %s62, %s64
      %p68 = scmp.eq.s32.totalorder %s14, 0
      %p69 = por %p67, %p68
      %p70 = scmp.ne.s32.totalorder %s62, %s64
      %p71 = scmp.eq.s32.totalorder %s19, 5
      %p72 = por %p70, %p71
      %p73 = scmp.ne.s32.totalorder %s64, %s65
      %p74 = scmp.eq.s32.totalorder %s19, 0
      %p75 = por %p73, %p74
      %p76 = scmp.ne.s32.totalorder %s64, %s65
      %p77 = scmp.eq.s32.totalorder %s20, 5
      %p78 = por %p76, %p77
      %p80 = scmp.ne.s32.totalorder %s65, %s79
      %p81 = scmp.eq.s32.totalorder %s20, 0
      %p82 = por %p80, %p81
      %s84 = sadd.s32 %s83, 1
      %p87 = scmp.eq.s32.totalorder %s14, 5
      %p88 = scmp.ne.s32.totalorder %s83, %s85
      %p89 = scmp.eq.s32.totalorder %s14, 0
      %p90 = por %p88, %p89
      %p91 = scmp.ne.s32.totalorder %s83, %s85
      %p92 = scmp.eq.s32.totalorder %s19, 5
      %p93 = por %p91, %p92
      %p94 = scmp.ne.s32.totalorder %s85, %s86
      %p95 = scmp.eq.s32.totalorder %s19, 0
      %p96 = por %p94, %p95
      %p97 = scmp.ne.s32.totalorder %s85, %s86
      %p98 = scmp.eq.s32.totalorder %s20, 5
      %p99 = por %p97, %p98
      %p101 = scmp.ne.s32.totalorder %s86, %s100
      %p102 = scmp.eq.s32.totalorder %s20, 0
      %p103 = por %p101, %p102
      %s105 = sadd.s32 %s104, 1
      %p108 = scmp.eq.s32.totalorder %s14, 5
      %p109 = scmp.ne.s32.totalorder %s104, %s106
      %p110 = scmp.eq.s32.totalorder %s14, 0
      %p111 = por %p109, %p110
      %p112 = scmp.ne.s32.totalorder %s104, %s106
      %p113 = scmp.eq.s32.totalorder %s19, 5
      %p114 = por %p112, %p113
      %p115 = scmp.ne.s32.totalorder %s106, %s107
      %p116 = scmp.eq.s32.totalorder %s19, 0
      %p117 = por %p115, %p116
      %p118 = scmp.ne.s32.totalorder %s106, %s107
      %p119 = scmp.eq.s32.totalorder %s20, 5
      %p120 = por %p118, %p119
      %p122 = scmp.ne.s32.totalorder %s107, %s121
      %p123 = scmp.eq.s32.totalorder %s20, 0
      %p124 = por %p122, %p123
      %s126 = sadd.s32 %s125, 1
      %p129 = scmp.eq.s32.totalorder %s14, 5
      %p130 = scmp.ne.s32.totalorder %s125, %s127
      %p131 = scmp.eq.s32.totalorder %s14, 0
      %p132 = por %p130, %p131
      %p133 = scmp.ne.s32.totalorder %s125, %s127
      %p134 = scmp.eq.s32.totalorder %s19, 5
      %p135 = por %p133, %p134
      %p136 = scmp.ne.s32.totalorder %s127, %s128
      %p137 = scmp.eq.s32.totalorder %s19, 0
      %p138 = por %p136, %p137
      %p139 = scmp.ne.s32.totalorder %s127, %s128
      %p140 = scmp.eq.s32.totalorder %s20, 5
      %p141 = por %p139, %p140
      %p143 = scmp.ne.s32.totalorder %s128, %s142
      %p144 = scmp.eq.s32.totalorder %s20, 0
      %p145 = por %p143, %p144
      %s146 = ssub.s32 %s21, %s33
      %p147 = scmp.eq.s32.totalorder %s146, 0
      %s149 = sadd.s32 %s148, 1
      %s150 = scalar_select %p147, %s148, %s149
      %p153 = pneg %p147
      %p154 = scmp.eq.s32.totalorder %s14, 5
      %p155 = por %p153, %p154
      %p156 = scmp.ne.s32.totalorder %s148, %s151
      %p157 = scmp.eq.s32.totalorder %s14, 0
      %p158 = por %p156, %p157
      %p159 = scmp.ne.s32.totalorder %s148, %s151
      %p160 = scmp.eq.s32.totalorder %s19, 5
      %p161 = por %p159, %p160
      %p162 = scmp.ne.s32.totalorder %s151, %s152
      %p163 = scmp.eq.s32.totalorder %s19, 0
      %p164 = por %p162, %p163
      %p165 = scmp.ne.s32.totalorder %s151, %s152
      %p166 = scmp.eq.s32.totalorder %s20, 5
      %p167 = por %p165, %p166
      %p169 = scmp.ne.s32.totalorder %s152, %s168
      %p170 = scmp.eq.s32.totalorder %s20, 0
      %p171 = por %p169, %p170
      %p172 = scmp.le.s32.totalorder 1, %s14
      %p173 = scmp.lt.s32.totalorder %s14, 7
      %p174 = pnand %p172, %p173
      %p175 = pneg %p174
      // Predicated region
      $region9: #{tpu_custom_call.1} parent=5 // pred_check
        _
      $region10: #{tpu_custom_call.1} parent=5 // pred_check_branch
        %177 = sbr.rel (%p174) target = $region12
      $region11: #{tpu_custom_call.1} parent=5 // pred_region
        %s178 = ssub.s32 %s14, 1
        // Predicated region
        $region13: #{tpu_custom_call.1} parent=11 // pred_check
          %p179 = pneg %p75
        $region14: #{tpu_custom_call.1} parent=11 // pred_check_branch
          %181 = sbr.rel (%p179) target = $region16
        $region15: #{tpu_custom_call.1} parent=11 // pred_region
          _
        $region16: #{tpu_custom_call.1} parent=11 // pred_fallthru
          _
        // Predicated region
        $region17: #{tpu_custom_call.1} parent=11 // pred_check
          %p182 = pneg %p96
        $region18: #{tpu_custom_call.1} parent=11 // pred_check_branch
          %184 = sbr.rel (%p182) target = $region20
        $region19: #{tpu_custom_call.1} parent=11 // pred_region
          _
        $region20: #{tpu_custom_call.1} parent=11 // pred_fallthru
          _
        // Predicated region
        $region21: #{tpu_custom_call.1} parent=11 // pred_check
          %p185 = pneg %p117
        $region22: #{tpu_custom_call.1} parent=11 // pred_check_branch
          %187 = sbr.rel (%p185) target = $region24
        $region23: #{tpu_custom_call.1} parent=11 // pred_region
          _
        $region24: #{tpu_custom_call.1} parent=11 // pred_fallthru
          _
        // Predicated region
        $region25: #{tpu_custom_call.1} parent=11 // pred_check
          %p188 = pneg %p138
        $region26: #{tpu_custom_call.1} parent=11 // pred_check_branch
          %190 = sbr.rel (%p188) target = $region28
        $region27: #{tpu_custom_call.1} parent=11 // pred_region
          _
        $region28: #{tpu_custom_call.1} parent=11 // pred_fallthru
          _
      $region12: #{tpu_custom_call.1} parent=5 // pred_fallthru
        _
      %p191 = scmp.lt.s32.totalorder %s14, 6
      // Predicated region
      $region29: #{tpu_custom_call.1} parent=5 // pred_check
        %p192 = pneg %p191
      $region30: #{tpu_custom_call.1} parent=5 // pred_check_branch
        %194 = sbr.rel (%p192) target = $region32
      $region31: #{tpu_custom_call.1} parent=5 // pred_region
        // Predicated region
        $region33: #{tpu_custom_call.1} parent=31 // pred_check
          %p195 = pneg %p48
        $region34: #{tpu_custom_call.1} parent=31 // pred_check_branch
          %197 = sbr.rel (%p195) target = $region36
        $region35: #{tpu_custom_call.1} parent=31 // pred_region
          %s198 = smul.u32 2, %s22
          %p199 = scmp.lt.s32.totalorder %s21, 1
          %s200 = scalar_select %p199, %s21, 1
          %p201 = scmp.lt.s32.totalorder %s198, 5
          %s202 = scalar_select %p201, %s198, 5
          %s203 = smul.addr %s200, 6
          %s204 = sadd.s32 %s202, %s203
          %s205 = smul.addr %s204, 4
          %s206 = scalar_lea.vmem %s0, %s205
          %s207 = smul.u32 2, %s22
        $region36: #{tpu_custom_call.1} parent=31 // pred_fallthru
          _
      $region32: #{tpu_custom_call.1} parent=5 // pred_fallthru
        _
      %p208 = scmp.le.s32.totalorder 1, %s14
      %p209 = scmp.lt.s32.totalorder %s14, 7
      %p210 = pnand %p208, %p209
      %p211 = pneg %p210
      // Predicated region
      $region37: #{tpu_custom_call.1} parent=5 // pred_check
        _
      $region38: #{tpu_custom_call.1} parent=5 // pred_check_branch
        %213 = sbr.rel (%p210) target = $region40
      $region39: #{tpu_custom_call.1} parent=5 // pred_region
        %s214 = ssub.s32 %s14, 1
        %s215 = smul.u32 2, %s24
        %p216 = scmp.lt.s32.totalorder %s23, 1
        %s217 = scalar_select %p216, %s23, 1
        %p218 = scmp.lt.s32.totalorder %s215, 5
        %s219 = scalar_select %p218, %s215, 5
        %s220 = smul.addr %s217, 6
        %s221 = sadd.s32 %s219, %s220
        %s222 = smul.addr %s221, 4
        %s223 = scalar_lea.vmem %s0, %s222
        %p224 = pneg %p54
        %p225 = pneg %p51
        %p226 = pneg %p75
        %p227 = pneg %p72
        %p228 = pneg %p96
        %p229 = pneg %p93
        %p230 = pneg %p117
        %p231 = pneg %p114
        %p232 = pneg %p138
        %p233 = pneg %p135
        %p234 = pneg %p164
        %p235 = pneg %p161
        %s236 = sand.u32 %s151, 1
        %s237 = scalar_lea.sflag [#allocation3], %s236
        %s238 = sand.u32 %s151, 1
        %s239 = scalar_lea.vmem [#allocation2], %s238
        %s240 = smul.u32 2, %s24
        %p241 = scmp.lt.s32.totalorder %s23, 1
        %s242 = scalar_select %p241, %s23, 1
        %p243 = scmp.lt.s32.totalorder %s240, 5
        %s244 = scalar_select %p243, %s240, 5
        %s245 = smul.addr %s242, 6
        %s246 = sadd.s32 %s244, %s245
        %s247 = smul.addr %s246, 4
        %s248 = scalar_lea.vmem %s0, %s247
        %s249 = smul.u32 2, %s24
        %p251 = scmp.eq.s32.totalorder %s24, 0
        // Predicated region
        $region41: #{tpu_custom_call.1} parent=39 // pred_check
          %p252 = pneg %p251
        $region42: #{tpu_custom_call.1} parent=39 // pred_check_branch
          %254 = sbr.rel (%p252) target = $region44
        $region43: #{tpu_custom_call.1} parent=39 // pred_region
          %255 = vst [vmem:[%s239] sm:$0x1] -inf
        $region44: #{tpu_custom_call.1} parent=39 // pred_fallthru
          _
        %v256 = vld [vmem:[%s248] sm:$0x7]
        %v257 = vld [vmem:[%s248 + $0x4] sm:$0x7]
        %v258 = vld [vmem:[%s1] sm:$0xff]
        %v259 = vld [vmem:[%s1 + $0x8] sm:$0xff]
        %v260 = vld [vmem:[%s1 + $0x10] sm:$0xff]
        %v261 = vld [vmem:[%s1 + $0x18] sm:$0xff]
        %v262 = vld [vmem:[%s1 + $0x20] sm:$0xff]
        %v263 = vld [vmem:[%s1 + $0x28] sm:$0xff]
        %v264 = vld [vmem:[%s1 + $0x30] sm:$0xff]
        %v265 = vld [vmem:[%s1 + $0x38] sm:$0xff]
        %v266 = vld [vmem:[%s1 + $0x40] sm:$0xff]
        %v267 = vld [vmem:[%s1 + $0x48] sm:$0xff]
        %v268 = vld [vmem:[%s1 + $0x50] sm:$0xff]
        %v269 = vld [vmem:[%s1 + $0x58] sm:$0xff]
        %v270 = vlaneseq
        %v271 = vshrl.u32 %v270, 7
        %v272 = vsub.s32 0, %v271
        %v273 = vrot.slane %v256, %v272
        %v274 = vlaneseq
        %v275 = vshrl.u32 %v274, 7
        %v276 = vsub.s32 0, %v275
        %v277 = vrot.slane %v257, %v276
        %279 = vset.pattern.permute.xlu0 0
        %280 = vperm.xlu0 %279, %v258
        %v281 = vpop.permute.xlu0 %280
        %284 = vset.pattern.permute.xlu0 0
        %285 = vperm.xlu0 %284, %v259
        %v286 = vpop.permute.xlu0 %285
        %289 = vset.pattern.permute.xlu0 0
        %290 = vperm.xlu0 %289, %v260
        %v291 = vpop.permute.xlu0 %290
        %294 = vset.pattern.permute.xlu0 0
        %295 = vperm.xlu0 %294, %v261
        %v296 = vpop.permute.xlu0 %295
        %v298 = vmul.f32 %v273, %v281
        %v299 = vmul.f32 %v273, %v286
        %v300 = vmul.f32 %v273, %v291
        %v301 = vmul.f32 %v273, %v296
        %v302 = vmul.f32 %v277, %v281
        %v303 = vmul.f32 %v277, %v286
        %v304 = vmul.f32 %v277, %v291
        %v305 = vmul.f32 %v277, %v296
        %v306 = vlaneseq
        %v307 = vshrl.u32 %v306, 7
        %v308 = vsub.s32 1, %v307
        %v309 = vrot.slane %v256, %v308
        %v310 = vlaneseq
        %v311 = vshrl.u32 %v310, 7
        %v312 = vsub.s32 1, %v311
        %v313 = vrot.slane %v257, %v312
        %315 = vset.pattern.permute.xlu0 0
        %316 = vperm.xlu0 %315, %v262
        %v317 = vpop.permute.xlu0 %316
        %320 = vset.pattern.permute.xlu0 0
        %321 = vperm.xlu0 %320, %v263
        %v322 = vpop.permute.xlu0 %321
        %325 = vset.pattern.permute.xlu0 0
        %326 = vperm.xlu0 %325, %v264
        %v327 = vpop.permute.xlu0 %326
        %330 = vset.pattern.permute.xlu0 0
        %331 = vperm.xlu0 %330, %v265
        %v332 = vpop.permute.xlu0 %331
        %v334 = vmul.f32 %v309, %v317
        %v335 = vmul.f32 %v309, %v322
        %v336 = vmul.f32 %v309, %v327
        %v337 = vmul.f32 %v309, %v332
        %v338 = vmul.f32 %v313, %v317
        %v339 = vmul.f32 %v313, %v322
        %v340 = vmul.f32 %v313, %v327
        %v341 = vmul.f32 %v313, %v332
        %v342 = vadd.f32 %v298, %v334
        %v343 = vadd.f32 %v299, %v335
        %v344 = vadd.f32 %v300, %v336
        %v345 = vadd.f32 %v301, %v337
        %v346 = vadd.f32 %v302, %v338
        %v347 = vadd.f32 %v303, %v339
        %v348 = vadd.f32 %v304, %v340
        %v349 = vadd.f32 %v305, %v341
        %v350 = vlaneseq
        %v351 = vshrl.u32 %v350, 7
        %v352 = vsub.s32 2, %v351
        %v353 = vrot.slane %v256, %v352
        %v354 = vlaneseq
        %v355 = vshrl.u32 %v354, 7
        %v356 = vsub.s32 2, %v355
        %v357 = vrot.slane %v257, %v356
        %359 = vset.pattern.permute.xlu0 0
        %360 = vperm.xlu0 %359, %v266
        %v361 = vpop.permute.xlu0 %360
        %364 = vset.pattern.permute.xlu0 0
        %365 = vperm.xlu0 %364, %v267
        %v366 = vpop.permute.xlu0 %365
        %369 = vset.pattern.permute.xlu0 0
        %370 = vperm.xlu0 %369, %v268
        %v371 = vpop.permute.xlu0 %370
        %374 = vset.pattern.permute.xlu0 0
        %375 = vperm.xlu0 %374, %v269
        %v376 = vpop.permute.xlu0 %375
        %v378 = vmul.f32 %v353, %v361
        %v379 = vmul.f32 %v353, %v366
        %v380 = vmul.f32 %v353, %v371
        %v381 = vmul.f32 %v353, %v376
        %v382 = vmul.f32 %v357, %v361
        %v383 = vmul.f32 %v357, %v366
        %v384 = vmul.f32 %v357, %v371
        %v385 = vmul.f32 %v357, %v376
        %v386 = vadd.f32 %v342, %v378
        %v387 = vadd.f32 %v343, %v379
        %v388 = vadd.f32 %v344, %v380
        %v389 = vadd.f32 %v345, %v381
        %v390 = vadd.f32 %v346, %v382
        %v391 = vadd.f32 %v347, %v383
        %v392 = vadd.f32 %v348, %v384
        %v393 = vadd.f32 %v349, %v385
        %v394 = vld [vmem:[%s2] sm:$0xff]
        %v395 = vld [vmem:[%s2 + $0x8] sm:$0xff]
        %v396 = vld [vmem:[%s2 + $0x10] sm:$0xff]
        %v397 = vld [vmem:[%s2 + $0x18] sm:$0xff]
        %399 = vset.pattern.permute.xlu0 0
        %400 = vperm.xlu0 %399, %v394
        %v401 = vpop.permute.xlu0 %400
        %404 = vset.pattern.permute.xlu0 0
        %405 = vperm.xlu0 %404, %v395
        %v406 = vpop.permute.xlu0 %405
        %409 = vset.pattern.permute.xlu0 0
        %410 = vperm.xlu0 %409, %v396
        %v411 = vpop.permute.xlu0 %410
        %414 = vset.pattern.permute.xlu0 0
        %415 = vperm.xlu0 %414, %v397
        %v416 = vpop.permute.xlu0 %415
        %v418 = vadd.f32 %v386, %v401
        %v419 = vadd.f32 %v387, %v406
        %v420 = vadd.f32 %v388, %v411
        %v421 = vadd.f32 %v389, %v416
        %v422 = vadd.f32 %v390, %v401
        %v423 = vadd.f32 %v391, %v406
        %v424 = vadd.f32 %v392, %v411
        %v425 = vadd.f32 %v393, %v416
        %v426 = vmax.f32 %v418, 0.0
        %v427 = vmax.f32 %v419, 0.0
        %v428 = vmax.f32 %v420, 0.0
        %v429 = vmax.f32 %v421, 0.0
        %v430 = vmax.f32 %v422, 0.0
        %v431 = vmax.f32 %v423, 0.0
        %v432 = vmax.f32 %v424, 0.0
        %v433 = vmax.f32 %v425, 0.0
        %vm434 = vcmask 523264
        %v435 = vsel %vm434, %v426, 0.0
        %436 = vadd.xlane.f32.xlu0 %v435
        %v437 = vpop.xlane.xlu0 %436
        %v438 = vsel %vm434, %v427, 0.0
        %439 = vadd.xlane.f32.xlu0 %v438
        %v440 = vpop.xlane.xlu0 %439
        %v441 = vsel %vm434, %v428, 0.0
        %442 = vadd.xlane.f32.xlu0 %v441
        %v443 = vpop.xlane.xlu0 %442
        %v444 = vsel %vm434, %v429, 0.0
        %445 = vadd.xlane.f32.xlu0 %v444
        %v446 = vpop.xlane.xlu0 %445
        %v447 = vsel %vm434, %v430, 0.0
        %448 = vadd.xlane.f32.xlu0 %v447
        %v449 = vpop.xlane.xlu0 %448
        %v450 = vsel %vm434, %v431, 0.0
        %451 = vadd.xlane.f32.xlu0 %v450
        %v452 = vpop.xlane.xlu0 %451
        %v453 = vsel %vm434, %v432, 0.0
        %454 = vadd.xlane.f32.xlu0 %v453
        %v455 = vpop.xlane.xlu0 %454
        %v456 = vsel %vm434, %v433, 0.0
        %457 = vadd.xlane.f32.xlu0 %v456
        %v458 = vpop.xlane.xlu0 %457
        %v459 = vmul.f32 %v437, 0.015625
        %v460 = vmul.f32 %v440, 0.015625
        %v461 = vmul.f32 %v443, 0.015625
        %v462 = vmul.f32 %v446, 0.015625
        %v463 = vmul.f32 %v449, 0.015625
        %v464 = vmul.f32 %v452, 0.015625
        %v465 = vmul.f32 %v455, 0.015625
        %v466 = vmul.f32 %v458, 0.015625
        %v467 = vpack.c.bf16 %v460, %v459
        %v468 = vpack.c.bf16 %v462, %v461
        %v469 = vpack.c.bf16 %v464, %v463
        %v470 = vpack.c.bf16 %v466, %v465
        %v471 = vld [vmem:[%s3] sm:$0xf]
        %v472 = vld [vmem:[%s3 + $0x4] sm:$0xf]
        %v473 = vld [vmem:[%s3 + $0x8] sm:$0xf]
        %v474 = vld [vmem:[%s3 + $0xc] sm:$0xf]
        %v475 = vld [vmem:[%s4] sm:$0x1]
        %v477 = vlaneseq
        %v478 = vshrl.u32 %v477, 7
        %v479 = vsub.s32 0, %v478
        %v480 = vrot.slane %v475, %v479
        %v486 = vunpack.c.l.b16 %v467
        %v487 = vunpack.c.h.b16 %v467
        %v488 = vunpack.c.l.b16 %v468
        %v489 = vunpack.c.h.b16 %v468
        %v490 = vunpack.c.l.b16 %v469
        %v491 = vunpack.c.h.b16 %v469
        %v492 = vunpack.c.l.b16 %v470
        %v493 = vunpack.c.h.b16 %v470
        %v494 = vlaneseq
        %v495 = vand.u32 %v494, 127
        %v496 = vlaneseq
        %v497 = vshrl.u32 %v496, 7
        %v498 = vsub.s32 %v495, %v497
        %v499 = vrot.slane %v486, %v498
        %v500 = vadd.s32 %v495, 4294967288
        %v501 = vlaneseq
        %v502 = vshrl.u32 %v501, 7
        %v503 = vsub.s32 %v500, %v502
        %v504 = vrot.slane %v487, %v503
        %vm505 = vcmask 130112
        %v506 = vsel %vm505, %v504, %v499
        %v507 = vadd.s32 %v495, 4294967280
        %v508 = vlaneseq
        %v509 = vshrl.u32 %v508, 7
        %v510 = vsub.s32 %v507, %v509
        %v511 = vrot.slane %v488, %v510
        %vm512 = vcmask 195712
        %v513 = vsel %vm512, %v511, %v506
        %v514 = vadd.s32 %v495, 4294967272
        %v515 = vlaneseq
        %v516 = vshrl.u32 %v515, 7
        %v517 = vsub.s32 %v514, %v516
        %v518 = vrot.slane %v489, %v517
        %vm519 = vcmask 261312
        %v520 = vsel %vm519, %v518, %v513
        %v521 = vlaneseq
        %v522 = vshrl.u32 %v521, 7
        %v523 = vsub.s32 %v495, %v522
        %v524 = vrot.slane %v490, %v523
        %v525 = vlaneseq
        %v526 = vshrl.u32 %v525, 7
        %v527 = vsub.s32 %v500, %v526
        %v528 = vrot.slane %v491, %v527
        %v529 = vsel %vm505, %v528, %v524
        %v530 = vlaneseq
        %v531 = vshrl.u32 %v530, 7
        %v532 = vsub.s32 %v507, %v531
        %v533 = vrot.slane %v492, %v532
        %v534 = vsel %vm512, %v533, %v529
        %v535 = vlaneseq
        %v536 = vshrl.u32 %v535, 7
        %v537 = vsub.s32 %v514, %v536
        %v538 = vrot.slane %v493, %v537
        %v539 = vsel %vm519, %v538, %v534
        %vm540 = vcmask 1041409
        %v541 = vsel %vm540, %v539, %v520
        %v542 = vpack.c.b16 %v541, %v541
        %v547 = vunpack.c.l.b16 %v471
        %v548 = vunpack.c.l.b16 %v472
        %v549 = vunpack.c.l.b16 %v473
        %v550 = vunpack.c.l.b16 %v474
        %v551 = vpack.c.b16 %v548, %v547
        %v552 = vpack.c.b16 %v550, %v549
        %vm555 = vcmask 261120
        %v557 = vsel %vm555, %v542, 0
        %559 = vmatprep.subr.bf16.mxu0 0
        %560 = vmatpush1.bf16.msra.mxu0 0
        %561 = vmatprep.subr.bf16.mxu0 0
        %562 = vmatpush1.bf16.msra.mxu0 0
        %563 = vmatprep.subr.bf16.mxu0 0
        %564 = vmatpush1.bf16.msra.mxu0 0
        %565 = vmatprep.subr.bf16.mxu0 0
        %566 = vmatpush1.bf16.msra.mxu0 0
        %567 = vmatprep.subr.bf16.mxu0 0
        %568 = vmatpush1.bf16.msra.mxu0 0
        %569 = vmatprep.subr.bf16.mxu0 0
        %570 = vmatpush1.bf16.msra.mxu0 0
        %571 = vmatprep.subr.bf16.mxu0 0
        %572 = vmatpush1.bf16.msra.mxu0 %v552
        %573 = vmatprep.subr.bf16.mxu0 0
        %574 = vmatpush1.bf16.msra.mxu0 %v551
        %575 = vmatprep.subr.bf16.mxu0 0
        %576 = vmatpush2.bf16.msra.mxu0 0
        %577 = vmatprep.subr.bf16.mxu0 0
        %578 = vmatpush2.bf16.msra.mxu0 0
        %579 = vmatprep.subr.bf16.mxu0 0
        %580 = vmatpush2.bf16.msra.mxu0 0
        %581 = vmatprep.subr.bf16.mxu0 0
        %582 = vmatpush2.bf16.msra.mxu0 0
        %583 = vmatprep.subr.bf16.mxu0 0
        %584 = vmatpush2.bf16.msra.mxu0 0
        %585 = vmatprep.subr.bf16.mxu0 0
        %586 = vmatpush2.bf16.msra.mxu0 0
        %587 = vmatprep.subr.bf16.mxu0 0
        %588 = vmatpush2.bf16.msra.mxu0 0
        %589 = vmatprep.subr.bf16.mxu0 0
        %590 = vmatpush2.bf16.msra.mxu0 0
        %591 = vmatprep.mubr.bf16.mxu0 0
        %592 = vmatmul.mubr.bf16.gmra.mxu0 %v557
        %v593 = vpop.f32.mrf.mxu0
        %v594 = vadd.f32 %v480, %v593
        %v595 = vpop.f32.mrf.mxu0
        %v596 = vpop.f32.mrf.mxu0
        %v597 = vpop.f32.mrf.mxu0
        %598 = vdwg.mxu0
        %vm599 = vcmask 1041408
        %v600 = vsel %vm599, %v594, -inf
        %v601 = vrot.slane %v600, 4
        %v602 = vmax.f32 %v600, %v601
        %v603 = vrot.slane %v602, 2
        %v604 = vmax.f32 %v602, %v603
        %v605 = vrot.slane %v604, 1
        %v606 = vmax.f32 %v604, %v605
        %v607 = vld [vmem:[%s239] sm:$0x1]
        %v608 = vmax.f32 %v607, %v606
        %609 = vst [vmem:[%s239] sm:$0x1] %v608
        %p610 = scmp.eq.s32.totalorder %s24, 2
        // Predicated region
        $region45: #{tpu_custom_call.1} parent=39 // pred_check
          %p611 = pneg %p610
        $region46: #{tpu_custom_call.1} parent=39 // pred_check_branch
          %613 = sbr.rel (%p611) target = $region48
        $region47: #{tpu_custom_call.1} parent=39 // pred_region
          %v614 = vld [vmem:[%s239] sm:$0x1]
          %v615 = vmax.f32 %v614, 0.0
          %616 = vst [vmem:[%s239] sm:$0x1] %v615
        $region48: #{tpu_custom_call.1} parent=39 // pred_fallthru
          _
        %s617 = sand.u32 %s151, 1
        %s618 = scalar_lea.sflag [#allocation3], %s617
        %s619 = sand.u32 %s151, 1
        %s620 = scalar_lea.vmem [#allocation2], %s619
        // Predicated region
        $region49: #{tpu_custom_call.1} parent=39 // pred_check
          %p621 = pneg %p161
        $region50: #{tpu_custom_call.1} parent=39 // pred_check_branch
          %623 = sbr.rel (%p621) target = $region52
        $region51: #{tpu_custom_call.1} parent=39 // pred_region
          %s625 = ssub.s32 16, 16
          %626 = vsyncadd %s618, %s625
          %s627 = smul.addr %s23, 16
          %s628 = scalar_lea.hbm %s5, %s627
          %s630 = sshll.u32 %s620, 4
          %s631 = int_to_ptr.vmem [resolvable:$true] %s630
          %633 = dma.vmem_to_hbm [thread:$0]  %s631, 16, %s628, %s618
        $region52: #{tpu_custom_call.1} parent=39 // pred_fallthru
          _
      $region40: #{tpu_custom_call.1} parent=5 // pred_fallthru
        _
      %p634 = scmp.le.s32.totalorder 2, %s14
      // Predicated region
      $region53: #{tpu_custom_call.1} parent=5 // pred_check
        %p635 = pneg %p634
      $region54: #{tpu_custom_call.1} parent=5 // pred_check_branch
        %637 = sbr.rel (%p635) target = $region56
      $region55: #{tpu_custom_call.1} parent=5 // pred_region
        %s638 = ssub.s32 %s14, 2
        // Predicated region
        $region57: #{tpu_custom_call.1} parent=55 // pred_check
          %p639 = pneg %p167
        $region58: #{tpu_custom_call.1} parent=55 // pred_check_branch
          %641 = sbr.rel (%p639) target = $region60
        $region59: #{tpu_custom_call.1} parent=55 // pred_region
          %s642 = sand.u32 %s152, 1
          %s643 = scalar_lea.sflag [#allocation3], %s642
          %s644 = sand.u32 %s152, 1
          %s645 = scalar_lea.vmem [#allocation2], %s644
          %646 = dma.done %s643, 16
        $region60: #{tpu_custom_call.1} parent=55 // pred_fallthru
          _
      $region56: #{tpu_custom_call.1} parent=5 // pred_fallthru
        _
    $region6: #{tpu_custom_call.1} parent=1 // loop_footer
      %s18 = sadd.s32 1, %s14
    $region7: #{tpu_custom_call.1} parent=1 // loop_footer_branch
      %13 = sbr.rel target = $region3
    $region8: #{tpu_custom_call.1} parent=1 // loop_exit
      _
    %647 = vsyncpa [#allocation3], 1
    %s648 = scalar_lea.sflag [#allocation3], 1
    %649 = vsyncpa %s648, 1

</llo_original>
